<compile_context>
chip_gen: v6e
topology: v6e:2x2x1
jax: 0.10.0
libtpu: 0.0.40
codegen_flags: <defaults>
</compile_context>

<pallas_src>
import jax
import jax.numpy as jnp
from jax.experimental import pallas as pl
from jax.experimental.pallas import tpu as pltpu

_LANE = 128
_SUBLANE = 8
# ~2 MiB per block: in + out, double-buffered, = 8 MiB of VMEM -> safe on
# v5e's 16 MiB default scoped VMEM and well within v6e/v7x.
_TARGET_BLOCK_BYTES = 2 * 1024 * 1024


def _round_up(x, m):
    return ((x + m - 1) // m) * m


# ---------------------------------------------------------------------------
# Kernel: dx = -lambda * g   (lambda is a runtime SMEM scalar)
# ---------------------------------------------------------------------------
def _neg_scale_kernel(lam_ref, g_ref, o_ref):
    # Scalar read from SMEM is free in a memory-bound kernel.  Multiply in
    # the gradient dtype (exact for f32; one bf16 rounding of lambda for bf16
    # grads, matching PyTorch's in-dtype multiply).
    neg_lam = (-lam_ref[0]).astype(o_ref.dtype)
    o_ref[...] = g_ref[...] * neg_lam


def _block_rows(rows, itemsize):
    """Byte-budgeted rows per (rows, 128) block, multiple of the 8-row sublane."""
    budget = (_TARGET_BLOCK_BYTES // (_LANE * itemsize)) // _SUBLANE * _SUBLANE
    budget = max(budget, _SUBLANE)
    # Ensure >= 2 grid steps for medium tensors so the "parallel" grid axis
    # can shard across both v7x TensorCores.
    half = _round_up(-(-rows // 2), _SUBLANE)
    return max(min(budget, half), _SUBLANE)


def _pallas_neg_scale(g, lambda_):
    """Compute -lambda_ * g with a tiled, lane-dense Pallas kernel."""
    orig_shape = g.shape
    dtype = g.dtype
    total = g.size
    if total == 0:
        return g

    lam = jnp.reshape(jnp.asarray(lambda_, dtype=jnp.float32), (1,))

    # Zero-copy 2-D lane-dense view whenever total % 128 == 0 (common case).
    flat = g.reshape(-1)
    pad = (-total) % _LANE
    if pad:
        # TODO(synk): ragged (non-128-multiple) sizes still pay a pad + slice
        # copy outside the kernel; aligned sizes are fully zero-copy.
        flat = jnp.pad(flat, (0, pad))
    rows = flat.size // _LANE
    g2 = flat.reshape(rows, _LANE)

    itemsize = jnp.dtype(dtype).itemsize
    if rows <= 2 * _SUBLANE:
        tr = rows  # single full-extent block (legal even if rows % 8 != 0)
    else:
        tr = _block_rows(rows, itemsize)
    grid = (pl.cdiv(rows, tr),)

    out = pl.pallas_call(
        _neg_scale_kernel,
        out_shape=jax.ShapeDtypeStruct((rows, _LANE), dtype),
        grid=grid,
        in_specs=[
            pl.BlockSpec(memory_space=pltpu.MemorySpace.SMEM),  # lambda scalar
            pl.BlockSpec((tr, _LANE), lambda i: (i, 0)),
        ],
        out_specs=pl.BlockSpec((tr, _LANE), lambda i: (i, 0)),
        # g2 is a dead temporary with identical shape/dtype -> reuse its HBM.
        input_output_aliases={1: 0},
        compiler_params=pltpu.CompilerParams(
            dimension_semantics=("parallel",),
        ),
    )(lam, g2)

    out = out.reshape(-1)
    if pad:
        out = out[:total]
    return out.reshape(orig_shape)


# ---------------------------------------------------------------------------
# GradientReversal as a custom-vjp function (lambda is a runtime scalar, so
# annealing it every step does NOT retrace/recompile the backward kernel).
# ---------------------------------------------------------------------------
@jax.custom_vjp
def gradient_reversal(x, lambda_=1.0):
    # Forward: identity (== x.clone() in PyTorch; JAX arrays are immutable).
    return x


def _grl_fwd(x, lambda_):
    return x, lambda_


def _grl_bwd(lambda_, g):
    dx = _pallas_neg_scale(g, lambda_)
    return dx, jnp.zeros_like(lambda_)  # lambda is not trained


gradient_reversal.defvjp(_grl_fwd, _grl_bwd)


class GradientReversal:
    """JAX/Pallas analogue of the PyTorch GradientReversal module.

    `lambda_` may be a Python float or a traced scalar (e.g. an annealed DANN
    schedule value); either way it is fed to the kernel as a runtime SMEM
    scalar, so changing it never forces a recompile.
    """

    def __init__(self, lambda_=1.0):
        self.lambda_ = lambda_

    def __call__(self, x):
        lam = jnp.asarray(self.lambda_, dtype=jnp.float32)
        return gradient_reversal(x, lam)


# ---------------------------------------------------------------------------
# Demo
# ---------------------------------------------------------------------------
if __name__ == "__main__":
    key = jax.random.PRNGKey(0)
    # layout: NCHW, matching the PyTorch convention.
    x = jax.random.normal(key, (2, 4, 16, 16), dtype=jnp.float32)

    grl = GradientReversal(lambda_=1.0)

    # Forward: identity.
    y = jax.block_until_ready(grl(x))
    assert y.shape == x.shape and y.dtype == x.dtype
    assert bool(jnp.allclose(y, x)), "forward must be identity"

    # Backward: gradients reversed (d/dx sum(GRL(x)) == -lambda * ones).
    g = jax.block_until_ready(jax.grad(lambda a: jnp.sum(grl(a)))(x))
    assert bool(jnp.allclose(g, -1.0 * jnp.ones_like(x))), "backward must reverse grads"

    # Multi-block (tiled, aligned, zero-copy) path with non-unit lambda.
    k1, k2 = jax.random.split(key)
    x1 = jax.random.normal(k1, (8, 1024), dtype=jnp.float32)
    grl2 = GradientReversal(lambda_=2.5)
    g1 = jax.block_until_ready(jax.grad(lambda a: jnp.sum(grl2(a)))(x1))
    assert bool(jnp.allclose(g1, -2.5 * jnp.ones_like(x1))), "tiled backward failed"

    # Ragged (non-128-multiple) path.
    x2 = jax.random.normal(k2, (3, 5, 7), dtype=jnp.float32)
    g2 = jax.block_until_ready(jax.grad(lambda a: jnp.sum(grl2(a)))(x2))
    assert bool(jnp.allclose(g2, -2.5 * jnp.ones_like(x2))), "ragged backward failed"

    # bf16 gradients: in-dtype multiply, dtype preserved.
    x3 = jax.random.normal(key, (4, 256), dtype=jnp.bfloat16)
    g3 = jax.block_until_ready(
        jax.grad(lambda a: jnp.sum(grl(a).astype(jnp.float32)))(x3)
    )
    assert g3.dtype == jnp.bfloat16
    assert bool(
        jnp.allclose(g3.astype(jnp.float32), -1.0 * jnp.ones((4, 256), jnp.float32))
    ), "bf16 backward failed"

    print("KERNEL_OK")
</pallas_src>

<mosaic_0001>
module attributes {stable_mosaic.version = 11 : i64} {
  func.func @_neg_scale_kernel(%arg0: i32, %arg1: memref<1xf32, #tpu.memory_space<smem>>, %arg2: memref<16x128xf32, #tpu.memory_space<vmem>>, %arg3: memref<16x128xf32, #tpu.memory_space<vmem>>) attributes {dimension_semantics = [#tpu.dimension_semantics<parallel>], iteration_bounds = array<i64: 1>, scalar_prefetch = 0 : i64, scratch_operands = 0 : i64, tpu.core_type = #tpu.core_type<tc>, window_params = [{transform_indices = @transform_0, window_bounds = array<i64: 1>}, {transform_indices = @transform_1, window_bounds = array<i64: 16, 128>}, {transform_indices = @transform_2, window_bounds = array<i64: 16, 128>}]} {
    %c0 = arith.constant 0 : index
    %0 = memref.load %arg1[%c0] : memref<1xf32, #tpu.memory_space<smem>>
    %cst = arith.constant 0.000000e+00 : f32
    %1 = arith.subf %cst, %0 : f32
    %c0_0 = arith.constant 0 : index
    %c0_1 = arith.constant 0 : index
    %2 = vector.load %arg2[%c0_0, %c0_1] : memref<16x128xf32, #tpu.memory_space<vmem>>, vector<16x128xf32>
    %3 = vector.broadcast %1 : f32 to vector<16x128xf32>
    %4 = arith.mulf %2, %3 : vector<16x128xf32>
    %c0_2 = arith.constant 0 : index
    %c0_3 = arith.constant 0 : index
    %5 = vector.load %arg3[%c0_2, %c0_3] : memref<16x128xf32, #tpu.memory_space<vmem>>, vector<16x128xf32>
    tpu.vector_store %arg3[%c0_2, %c0_3], %4 {strides = array<i32>} : memref<16x128xf32, #tpu.memory_space<vmem>>, vector<16x128xf32>,
    return
  }
  func.func @transform_0(%arg0: i32) -> i32 {
    %c0_i32 = arith.constant 0 : i32
    %c0_i32_0 = arith.constant 0 : i32
    return %c0_i32 : i32
  }
  func.func @transform_1(%arg0: i32) -> (i32, i32) {
    %c0_i32 = arith.constant 0 : i32
    %c0_i32_0 = arith.constant 0 : i32
    return %arg0, %c0_i32 : i32, i32
  }
  func.func @transform_2(%arg0: i32) -> (i32, i32) {
    %c0_i32 = arith.constant 0 : i32
    %c0_i32_0 = arith.constant 0 : i32
    return %arg0, %c0_i32 : i32, i32
  }
}

</mosaic_0001>

<llo_original>
// kernel: tpu_custom_call.1
$region0: #{tpu_custom_call.1}
  #allocation0 [shape = 'u32[]', space=smem, size = 0x4, offset = 0x4, fixed_abs, tag = 'smem constant byte address 0x4 - core index']
  #allocation1 [shape = 'u32[144,128]{1,0:T(1,128)}', space=vmem, size = 0x12000, scoped, tag = 'internal scratch']
  #allocation2 [shape = 'f32[1]{0:T(128)S(6)}', space=smem, size = 0x200, scoped, tag = 'scoped memory for tpu_custom_call.1']
  %s0 = inlined_call_operand.<no memory space> [shape: f32[1], index: 0, kind: input, shape index: {}]
  %s1 = inlined_call_operand.hbm [shape: f32[16,128], index: 1, kind: input, shape index: {}, may-alias: {1,2}]
  %s2 = inlined_call_operand.hbm [shape: f32[16,128], index: 2, kind: output, shape index: {}, may-alias: {1,2}]
  %s3 = sld [smem:[#allocation0]]
  $region22: #{tpu_custom_call.1} parent=0
    _
  %s5 = ssub.s32 1, %s3
  %s6 = scalar_select 0, %s5, %s3
  %7 = sst [smem:[#allocation2]] %s0
  $region1: #{tpu_custom_call.1} parent=0
    #allocation3 [shape = 'u8[8192]{0}', space=vmem, size = 0x2000, scoped, tag = 'input window, operand 1, single buffered']
    #allocation4 [shape = 's32[1]{0}', space=sflag, size = 0x4, scoped, tag = 'scoped memory for tpu_custom_call.1']
    #allocation5 [shape = 's32[1]{0}', space=sflag, size = 0x4, scoped, tag = 'scoped memory for tpu_custom_call.1']
    #allocation6 [shape = 'u8[8192]{0}', space=vmem, size = 0x2000, scoped, tag = 'output window, operand 0, single buffered']
    %8 = vsyncpa [#allocation4], 0
    %9 = vsyncpa [#allocation5], 0
    // Predicated region
    $region2: #{tpu_custom_call.1} parent=1 // pred_check
      _
    $region3: #{tpu_custom_call.1} parent=1 // pred_check_branch
      %11 = sbr.rel (0) target = $region5
    $region4: #{tpu_custom_call.1} parent=1 // pred_region
      _
    $region5: #{tpu_custom_call.1} parent=1 // pred_fallthru
      _
    // Predicated region
    $region6: #{tpu_custom_call.1} parent=1 // pred_check
      _
    $region7: #{tpu_custom_call.1} parent=1 // pred_check_branch
      %13 = sbr.rel (0) target = $region9
    $region8: #{tpu_custom_call.1} parent=1 // pred_region
      %s15 = ssub.s32 256, 256
      %16 = vsyncadd [#allocation4], %s15
      %s17 = sshll.u32 [#allocation3], 4
      %s18 = int_to_ptr.vmem [resolvable:$true] %s17
      %23 = dma.hbm_to_vmem [thread:$0]  %s1, 256, %s18, [#allocation4], 128, 128, 8
    $region9: #{tpu_custom_call.1} parent=1 // pred_fallthru
      _
    // Predicated region
    $region10: #{tpu_custom_call.1} parent=1 // pred_check
      _
    $region11: #{tpu_custom_call.1} parent=1 // pred_check_branch
      %25 = sbr.rel (0) target = $region13
    $region12: #{tpu_custom_call.1} parent=1 // pred_region
      %26 = dma.done [#allocation4], 256
    $region13: #{tpu_custom_call.1} parent=1 // pred_fallthru
      _
    %s27 = sld [smem:[#allocation2]]
    %s28 = ssub.f32 0.0, %s27
    %v29 = vld [vmem:[#allocation3] sm:$0xff]
    %v30 = vld [vmem:[#allocation3 + $0x8] sm:$0xff]
    %v31 = vstv %s28
    %v32 = vmul.f32 %v29, %v31
    %v33 = vmul.f32 %v30, %v31
    %34 = vst [vmem:[#allocation6] sm:$0xff] %v32
    %35 = vst [vmem:[#allocation6 + $0x8] sm:$0xff] %v33
    // Predicated region
    $region14: #{tpu_custom_call.1} parent=1 // pred_check
      _
    $region15: #{tpu_custom_call.1} parent=1 // pred_check_branch
      %37 = sbr.rel (0) target = $region17
    $region16: #{tpu_custom_call.1} parent=1 // pred_region
      %s39 = ssub.s32 256, 256
      %40 = vsyncadd [#allocation5], %s39
      %s41 = sshll.u32 [#allocation6], 4
      %s42 = int_to_ptr.vmem [resolvable:$true] %s41
      %47 = dma.vmem_to_hbm [thread:$0]  %s42, 256, %s2, [#allocation5], 128, 128, 8
    $region17: #{tpu_custom_call.1} parent=1 // pred_fallthru
      _
    // Predicated region
    $region18: #{tpu_custom_call.1} parent=1 // pred_check
      _
    $region19: #{tpu_custom_call.1} parent=1 // pred_check_branch
      %49 = sbr.rel (0) target = $region21
    $region20: #{tpu_custom_call.1} parent=1 // pred_region
      %50 = dma.done [#allocation5], 256
    $region21: #{tpu_custom_call.1} parent=1 // pred_fallthru
      _
    %51 = vsyncpa [#allocation4], 1
    %52 = vsyncpa [#allocation5], 1

</llo_original>
